<compile_context>
chip_gen: v6e
topology: v6e:2x2x1
jax: 0.10.0
libtpu: 0.0.40
codegen_flags: <defaults>
</compile_context>

<pallas_src>
import math

import jax
import jax.numpy as jnp
from jax.experimental import pallas as pl
from jax.experimental.pallas import tpu as pltpu


def _make_packed_kernel(cutoff: float, r_group: int):
    """Lane-dense kernel: R consecutive edges share one output row of R*n_rbf lanes."""

    def kernel(d_ref, n_ref, sel_ref, out_ref):
        # d_ref:   (TS, R)        grouped distances (R edges per row)
        # n_ref:   (1, R*n_rbf)   n tiled R times:  n_tiled[j] = n[j % n_rbf]
        # sel_ref: (R, R*n_rbf)   0/1 selector:     sel[r, j] = (j // n_rbf == r)
        # out_ref: (TS, R*n_rbf)  out[s, r*n_rbf + k] = rbf(d[s, r], n[k])
        d = d_ref[...]                                  # (TS, R)
        sel = sel_ref[...]                              # (R, RN)

        # Lane-expand: d_wide[s, r*n_rbf + k] = d[s, r].
        # Exact on the VPU: exactly one term per lane is d * 1.0, the rest are
        # d' * 0.0 == 0.0 (distances are finite and non-negative).
        d_wide = d[:, 0:1] * sel[0:1, :]
        for r in range(1, r_group):
            d_wide = d_wide + d[:, r:r + 1] * sel[r:r + 1, :]

        coef = n_ref[...] * (math.pi / cutoff)          # (1, RN)
        zero = d_wide == 0.0
        denom = jnp.where(zero, 1.0, d_wide)
        num = jnp.where(zero, coef, jnp.sin(coef * d_wide))
        out = jnp.where(d_wide >= cutoff, 0.0, num / denom)
        out_ref[...] = out.astype(out_ref.dtype)

    return kernel


def _make_simple_kernel(cutoff: float):
    """Fallback kernel (output last dim = n_rbf) for awkward n_rbf values."""

    def kernel(d_ref, n_ref, out_ref):
        d = d_ref[...]                                  # (TM, 1)
        coef = n_ref[...] * (math.pi / cutoff)          # (1, n_rbf)
        zero = d == 0.0
        denom = jnp.where(zero, 1.0, d)
        num = jnp.where(zero, coef, jnp.sin(coef * d))
        out = jnp.where(d >= cutoff, 0.0, num / denom)
        out_ref[...] = out.astype(out_ref.dtype)

    return kernel


def _cdiv(a: int, b: int) -> int:
    return -(-a // b)


def painn_radial_basis(dist: jax.Array, n_param: jax.Array, cutoff: float, *,
                       tile_rows: int = 2048, tile_edges: int = 8192,
                       out_dtype=jnp.float32) -> jax.Array:
    """Pallas implementation of PainnRadialBasis.forward.

    Args:
      dist:    distances of arbitrary shape.
      n_param: (n_rbf,) the (possibly learnable) `self.n` values.
      cutoff:  python float cutoff.
      out_dtype: output dtype (f32 matches PyTorch; bf16 halves HBM writes).

    Returns:
      dist.shape + (n_rbf,) array.
    """
    orig_shape = tuple(dist.shape)
    cutoff = float(cutoff)
    n_rbf = n_param.shape[0]
    n_f32 = n_param.astype(jnp.float32)

    d_flat = dist.reshape(-1).astype(jnp.float32)
    e = d_flat.shape[0]
    if e == 0:
        return jnp.zeros(orig_shape + (n_rbf,), out_dtype)

    # Smallest group size R such that R * n_rbf is a multiple of 128.
    r_group = 128 // math.gcd(n_rbf, 128)

    if r_group <= 16:
        # ---- lane-dense packed path ----
        rn = r_group * n_rbf
        s = _cdiv(e, r_group)
        e_pad = s * r_group
        if e_pad != e:
            # Pad with `cutoff` (< r_group extra edges) so the discarded tail
            # rows compute plain zeros; sliced off after the free reshape.
            d_flat = jnp.pad(d_flat, (0, e_pad - e), constant_values=cutoff)
        d2 = d_flat.reshape(s, r_group)
        n_tiled = jnp.tile(n_f32, (r_group,)).reshape(1, rn)
        sel = (jnp.arange(rn, dtype=jnp.int32)[None, :] // n_rbf
               == jnp.arange(r_group, dtype=jnp.int32)[:, None]).astype(jnp.float32)

        ts = min(tile_rows, s)          # single block for small inputs
        grid = (_cdiv(s, ts),)          # partial last block handled by Pallas
        out = pl.pallas_call(
            _make_packed_kernel(cutoff, r_group),
            out_shape=jax.ShapeDtypeStruct((s, rn), out_dtype),
            grid_spec=pltpu.PrefetchScalarGridSpec(
                num_scalar_prefetch=0,
                grid=grid,
                in_specs=[
                    pl.BlockSpec((ts, r_group), lambda i: (i, 0)),
                    pl.BlockSpec((1, rn), lambda i: (0, 0)),
                    pl.BlockSpec((r_group, rn), lambda i: (0, 0)),
                ],
                out_specs=pl.BlockSpec((ts, rn), lambda i: (i, 0)),
            ),
            compiler_params=pltpu.CompilerParams(
                dimension_semantics=("parallel",)),
        )(d2, n_tiled, sel)

        out = out.reshape(e_pad, n_rbf)   # bit-identical contiguous reshape (free)
        if e_pad != e:
            out = out[:e]
    else:
        # ---- fallback path: original layout, large tiles, no pad/slice ----
        d2 = d_flat.reshape(e, 1)
        n2 = n_f32.reshape(1, n_rbf)
        tm = min(tile_edges, e)
        grid = (_cdiv(e, tm),)
        out = pl.pallas_call(
            _make_simple_kernel(cutoff),
            out_shape=jax.ShapeDtypeStruct((e, n_rbf), out_dtype),
            grid_spec=pltpu.PrefetchScalarGridSpec(
                num_scalar_prefetch=0,
                grid=grid,
                in_specs=[
                    pl.BlockSpec((tm, 1), lambda i: (i, 0)),
                    pl.BlockSpec((1, n_rbf), lambda i: (0, 0)),
                ],
                out_specs=pl.BlockSpec((tm, n_rbf), lambda i: (i, 0)),
            ),
            compiler_params=pltpu.CompilerParams(
                dimension_semantics=("parallel",)),
        )(d2, n2)

    return out.reshape(*orig_shape, n_rbf)


def painn_radial_basis_ref(dist, n_param, cutoff):
    """Pure-JAX reference mirroring the PyTorch forward exactly."""
    shape_d = dist[..., None].astype(jnp.float32)
    coef = n_param.astype(jnp.float32) * math.pi / cutoff
    denom = jnp.where(shape_d == 0, 1.0, shape_d)
    num = jnp.where(shape_d == 0, coef, jnp.sin(coef * shape_d))
    return jnp.where(shape_d >= cutoff, 0.0, num / denom)


if __name__ == "__main__":
    # Module hyperparameters (deterministic, synthetic).
    n_rbf = 16
    cutoff = 5.0
    n_param = jnp.arange(1, n_rbf + 1, dtype=jnp.float32)   # self.n

    # Distances: includes exact zero and exact cutoff to hit every branch.
    key = jax.random.PRNGKey(0)
    n_edges = 200
    dist = jax.random.uniform(key, (n_edges,), dtype=jnp.float32,
                              minval=0.0, maxval=6.0)
    dist = dist.at[0].set(0.0)
    dist = dist.at[1].set(cutoff)

    out = jax.block_until_ready(painn_radial_basis(dist, n_param, cutoff))
    ref = painn_radial_basis_ref(dist, n_param, cutoff)
    assert out.shape == (n_edges, n_rbf), out.shape
    assert jnp.allclose(out, ref, atol=1e-5, rtol=1e-5), "mismatch (packed path)"

    # E not a multiple of the packing group -> exercises the tiny pad + slice tail.
    dist_odd = dist[:37]
    out_odd = jax.block_until_ready(painn_radial_basis(dist_odd, n_param, cutoff))
    assert out_odd.shape == (37, n_rbf)
    assert jnp.allclose(out_odd, painn_radial_basis_ref(dist_odd, n_param, cutoff),
                        atol=1e-5, rtol=1e-5), "mismatch (padded tail)"

    # n_rbf with no compact 128-lane packing -> exercises the fallback kernel.
    n_rbf2 = 20
    n_param2 = jnp.arange(1, n_rbf2 + 1, dtype=jnp.float32)
    out2 = jax.block_until_ready(painn_radial_basis(dist, n_param2, cutoff))
    assert out2.shape == (n_edges, n_rbf2)
    assert jnp.allclose(out2, painn_radial_basis_ref(dist, n_param2, cutoff),
                        atol=1e-5, rtol=1e-5), "mismatch (fallback path)"

    print("KERNEL_OK")
</pallas_src>

<mosaic_0001>
module attributes {stable_mosaic.version = 11 : i64} {
  func.func @kernel(%arg0: i32, %arg1: memref<25x8xf32, #tpu.memory_space<vmem>>, %arg2: memref<1x128xf32, #tpu.memory_space<vmem>>, %arg3: memref<8x128xf32, #tpu.memory_space<vmem>>, %arg4: memref<25x128xf32, #tpu.memory_space<vmem>>) attributes {dimension_semantics = [#tpu.dimension_semantics<parallel>], iteration_bounds = array<i64: 1>, scalar_prefetch = 0 : i64, scratch_operands = 0 : i64, tpu.core_type = #tpu.core_type<tc>, window_params = [{transform_indices = @transform_0, window_bounds = array<i64: 25, 8>}, {pipeline_mode = #tpu.pipeline_mode<synchronous>, transform_indices = @transform_1, window_bounds = array<i64: 1, 128>}, {pipeline_mode = #tpu.pipeline_mode<synchronous>, transform_indices = @transform_2, window_bounds = array<i64: 8, 128>}, {transform_indices = @transform_3, window_bounds = array<i64: 25, 128>}]} {
    %c0 = arith.constant 0 : index
    %c0_0 = arith.constant 0 : index
    %0 = vector.load %arg1[%c0, %c0_0] : memref<25x8xf32, #tpu.memory_space<vmem>>, vector<25x8xf32>
    %c0_1 = arith.constant 0 : index
    %c0_2 = arith.constant 0 : index
    %1 = vector.load %arg3[%c0_1, %c0_2] : memref<8x128xf32, #tpu.memory_space<vmem>>, vector<8x128xf32>
    %2 = vector.extract_strided_slice %0 {offsets = [0, 0], sizes = [25, 1], strides = [1, 1]} : vector<25x8xf32> to vector<25x1xf32>
    %3 = vector.extract_strided_slice %1 {offsets = [0, 0], sizes = [1, 128], strides = [1, 1]} : vector<8x128xf32> to vector<1x128xf32>
    %4 = vector.broadcast %2 : vector<25x1xf32> to vector<25x128xf32>
    %5 = vector.broadcast %3 : vector<1x128xf32> to vector<25x128xf32>
    %6 = arith.mulf %4, %5 : vector<25x128xf32>
    %7 = vector.extract_strided_slice %0 {offsets = [0, 1], sizes = [25, 1], strides = [1, 1]} : vector<25x8xf32> to vector<25x1xf32>
    %8 = vector.extract_strided_slice %1 {offsets = [1, 0], sizes = [1, 128], strides = [1, 1]} : vector<8x128xf32> to vector<1x128xf32>
    %9 = vector.broadcast %7 : vector<25x1xf32> to vector<25x128xf32>
    %10 = vector.broadcast %8 : vector<1x128xf32> to vector<25x128xf32>
    %11 = arith.mulf %9, %10 : vector<25x128xf32>
    %12 = arith.addf %6, %11 : vector<25x128xf32>
    %13 = vector.extract_strided_slice %0 {offsets = [0, 2], sizes = [25, 1], strides = [1, 1]} : vector<25x8xf32> to vector<25x1xf32>
    %14 = vector.extract_strided_slice %1 {offsets = [2, 0], sizes = [1, 128], strides = [1, 1]} : vector<8x128xf32> to vector<1x128xf32>
    %15 = vector.broadcast %13 : vector<25x1xf32> to vector<25x128xf32>
    %16 = vector.broadcast %14 : vector<1x128xf32> to vector<25x128xf32>
    %17 = arith.mulf %15, %16 : vector<25x128xf32>
    %18 = arith.addf %12, %17 : vector<25x128xf32>
    %19 = vector.extract_strided_slice %0 {offsets = [0, 3], sizes = [25, 1], strides = [1, 1]} : vector<25x8xf32> to vector<25x1xf32>
    %20 = vector.extract_strided_slice %1 {offsets = [3, 0], sizes = [1, 128], strides = [1, 1]} : vector<8x128xf32> to vector<1x128xf32>
    %21 = vector.broadcast %19 : vector<25x1xf32> to vector<25x128xf32>
    %22 = vector.broadcast %20 : vector<1x128xf32> to vector<25x128xf32>
    %23 = arith.mulf %21, %22 : vector<25x128xf32>
    %24 = arith.addf %18, %23 : vector<25x128xf32>
    %25 = vector.extract_strided_slice %0 {offsets = [0, 4], sizes = [25, 1], strides = [1, 1]} : vector<25x8xf32> to vector<25x1xf32>
    %26 = vector.extract_strided_slice %1 {offsets = [4, 0], sizes = [1, 128], strides = [1, 1]} : vector<8x128xf32> to vector<1x128xf32>
    %27 = vector.broadcast %25 : vector<25x1xf32> to vector<25x128xf32>
    %28 = vector.broadcast %26 : vector<1x128xf32> to vector<25x128xf32>
    %29 = arith.mulf %27, %28 : vector<25x128xf32>
    %30 = arith.addf %24, %29 : vector<25x128xf32>
    %31 = vector.extract_strided_slice %0 {offsets = [0, 5], sizes = [25, 1], strides = [1, 1]} : vector<25x8xf32> to vector<25x1xf32>
    %32 = vector.extract_strided_slice %1 {offsets = [5, 0], sizes = [1, 128], strides = [1, 1]} : vector<8x128xf32> to vector<1x128xf32>
    %33 = vector.broadcast %31 : vector<25x1xf32> to vector<25x128xf32>
    %34 = vector.broadcast %32 : vector<1x128xf32> to vector<25x128xf32>
    %35 = arith.mulf %33, %34 : vector<25x128xf32>
    %36 = arith.addf %30, %35 : vector<25x128xf32>
    %37 = vector.extract_strided_slice %0 {offsets = [0, 6], sizes = [25, 1], strides = [1, 1]} : vector<25x8xf32> to vector<25x1xf32>
    %38 = vector.extract_strided_slice %1 {offsets = [6, 0], sizes = [1, 128], strides = [1, 1]} : vector<8x128xf32> to vector<1x128xf32>
    %39 = vector.broadcast %37 : vector<25x1xf32> to vector<25x128xf32>
    %40 = vector.broadcast %38 : vector<1x128xf32> to vector<25x128xf32>
    %41 = arith.mulf %39, %40 : vector<25x128xf32>
    %42 = arith.addf %36, %41 : vector<25x128xf32>
    %43 = vector.extract_strided_slice %0 {offsets = [0, 7], sizes = [25, 1], strides = [1, 1]} : vector<25x8xf32> to vector<25x1xf32>
    %44 = vector.extract_strided_slice %1 {offsets = [7, 0], sizes = [1, 128], strides = [1, 1]} : vector<8x128xf32> to vector<1x128xf32>
    %45 = vector.broadcast %43 : vector<25x1xf32> to vector<25x128xf32>
    %46 = vector.broadcast %44 : vector<1x128xf32> to vector<25x128xf32>
    %47 = arith.mulf %45, %46 : vector<25x128xf32>
    %48 = arith.addf %42, %47 : vector<25x128xf32>
    %c0_3 = arith.constant 0 : index
    %c0_4 = arith.constant 0 : index
    %49 = vector.load %arg2[%c0_3, %c0_4] : memref<1x128xf32, #tpu.memory_space<vmem>>, vector<1x128xf32>
    %cst = arith.constant 0.628318548 : f32
    %50 = vector.broadcast %cst : f32 to vector<1x128xf32>
    %51 = arith.mulf %49, %50 : vector<1x128xf32>
    %cst_5 = arith.constant 0.000000e+00 : f32
    %52 = vector.broadcast %cst_5 : f32 to vector<25x128xf32>
    %53 = arith.cmpf oeq, %48, %52 : vector<25x128xf32>
    %cst_6 = arith.constant 1.000000e+00 : f32
    %54 = vector.broadcast %cst_6 : f32 to vector<25x128xf32>
    %55 = arith.select %53, %54, %48 : vector<25x128xi1>, vector<25x128xf32>
    %56 = vector.broadcast %51 : vector<1x128xf32> to vector<25x128xf32>
    %57 = arith.mulf %56, %48 : vector<25x128xf32>
    %58 = math.sin %57 : vector<25x128xf32>
    %59 = vector.shape_cast %51 : vector<1x128xf32> to vector<1x128xf32>
    %60 = vector.broadcast %59 : vector<1x128xf32> to vector<25x128xf32>
    %61 = arith.select %53, %60, %58 : vector<25x128xi1>, vector<25x128xf32>
    %cst_7 = arith.constant 5.000000e+00 : f32
    %62 = vector.broadcast %cst_7 : f32 to vector<25x128xf32>
    %63 = arith.cmpf oge, %48, %62 : vector<25x128xf32>
    %64 = arith.divf %61, %55 : vector<25x128xf32>
    %cst_8 = arith.constant 0.000000e+00 : f32
    %65 = vector.broadcast %cst_8 : f32 to vector<25x128xf32>
    %66 = arith.select %63, %65, %64 : vector<25x128xi1>, vector<25x128xf32>
    %c0_9 = arith.constant 0 : index
    %c0_10 = arith.constant 0 : index
    %67 = vector.load %arg4[%c0_9, %c0_10] : memref<25x128xf32, #tpu.memory_space<vmem>>, vector<25x128xf32>
    tpu.vector_store %arg4[%c0_9, %c0_10], %66 {strides = array<i32>} : memref<25x128xf32, #tpu.memory_space<vmem>>, vector<25x128xf32>,
    return
  }
  func.func @transform_0(%arg0: i32) -> (i32, i32) {
    %c0_i32 = arith.constant 0 : i32
    %c0_i32_0 = arith.constant 0 : i32
    return %arg0, %c0_i32 : i32, i32
  }
  func.func @transform_1(%arg0: i32) -> (i32, i32) {
    %c0_i32 = arith.constant 0 : i32
    %c0_i32_0 = arith.constant 0 : i32
    %c0_i32_1 = arith.constant 0 : i32
    return %c0_i32, %c0_i32_0 : i32, i32
  }
  func.func @transform_2(%arg0: i32) -> (i32, i32) {
    %c0_i32 = arith.constant 0 : i32
    %c0_i32_0 = arith.constant 0 : i32
    %c0_i32_1 = arith.constant 0 : i32
    return %c0_i32, %c0_i32_0 : i32, i32
  }
  func.func @transform_3(%arg0: i32) -> (i32, i32) {
    %c0_i32 = arith.constant 0 : i32
    %c0_i32_0 = arith.constant 0 : i32
    return %arg0, %c0_i32 : i32, i32
  }
}

</mosaic_0001>

<llo_original>
// kernel: tpu_custom_call.1
$region0: #{tpu_custom_call.1}
  #allocation0 [shape = 'u32[]', space=smem, size = 0x4, offset = 0x4, fixed_abs, tag = 'smem constant byte address 0x4 - core index']
  #allocation1 [shape = 'u32[144,128]{1,0:T(1,128)}', space=vmem, size = 0x12000, scoped, tag = 'internal scratch']
  %s0 = inlined_call_operand.vmem [shape: f32[25,8], index: 0, kind: input, shape index: {}]
  %s1 = inlined_call_operand.vmem [shape: f32[1,128], index: 1, kind: input, shape index: {}]
  %s2 = inlined_call_operand.vmem [shape: f32[8,128], index: 2, kind: input, shape index: {}]
  %s3 = inlined_call_operand.hbm [shape: f32[25,128], index: 3, kind: output, shape index: {}]
  %s4 = sld [smem:[#allocation0]]
  $region22: #{tpu_custom_call.1} parent=0
    _
  %s6 = ssub.s32 1, %s4
  %s7 = scalar_select 0, %s6, %s4
  $region1: #{tpu_custom_call.1} parent=0
    #allocation2 [shape = 'u8[16384]{0}', space=vmem, size = 0x4000, scoped, tag = 'output window, operand 0, single buffered']
    #allocation3 [shape = 's32[1]{0}', space=sflag, size = 0x4, scoped, tag = 'scoped memory for tpu_custom_call.1']
    %8 = vsyncpa [#allocation3], 0
    // Predicated region
    $region2: #{tpu_custom_call.1} parent=1 // pred_check
      _
    $region3: #{tpu_custom_call.1} parent=1 // pred_check_branch
      %10 = sbr.rel (0) target = $region5
    $region4: #{tpu_custom_call.1} parent=1 // pred_region
      _
    $region5: #{tpu_custom_call.1} parent=1 // pred_fallthru
      _
    // Predicated region
    $region6: #{tpu_custom_call.1} parent=1 // pred_check
      _
    $region7: #{tpu_custom_call.1} parent=1 // pred_check_branch
      %12 = sbr.rel (0) target = $region9
    $region8: #{tpu_custom_call.1} parent=1 // pred_region
      _
    $region9: #{tpu_custom_call.1} parent=1 // pred_fallthru
      _
    // Predicated region
    $region10: #{tpu_custom_call.1} parent=1 // pred_check
      _
    $region11: #{tpu_custom_call.1} parent=1 // pred_check_branch
      %14 = sbr.rel (0) target = $region13
    $region12: #{tpu_custom_call.1} parent=1 // pred_region
      _
    $region13: #{tpu_custom_call.1} parent=1 // pred_fallthru
      _
    %v15 = vld [vmem:[%s0] sm:$0xff]
    %v16 = vld [vmem:[%s0 + $0x8] sm:$0xff]
    %v17 = vld [vmem:[%s0 + $0x10] sm:$0xff]
    %v18 = vld [vmem:[%s0 + $0x18] sm:$0x1]
    %v19 = vld [vmem:[%s2] sm:$0xff]
    %21 = vset.pattern.permute.xlu0 0
    %22 = vperm.xlu0 %21, %v15
    %v23 = vpop.permute.xlu0 %22
    %26 = vset.pattern.permute.xlu0 0
    %27 = vperm.xlu0 %26, %v16
    %v28 = vpop.permute.xlu0 %27
    %31 = vset.pattern.permute.xlu0 0
    %32 = vperm.xlu0 %31, %v17
    %v33 = vpop.permute.xlu0 %32
    %36 = vset.pattern.permute.xlu0 0
    %37 = vperm.xlu0 %36, %v18
    %v38 = vpop.permute.xlu0 %37
    %v40 = vlaneseq
    %v41 = vshrl.u32 %v40, 7
    %v42 = vsub.s32 0, %v41
    %v43 = vrot.slane %v19, %v42
    %v44 = vmul.f32 %v23, %v43
    %v45 = vmul.f32 %v28, %v43
    %v46 = vmul.f32 %v33, %v43
    %v47 = vmul.f32 %v38, %v43
    %48 = vset.pattern.permute.xlu0 1
    %49 = vperm.xlu0 %48, %v15
    %v50 = vpop.permute.xlu0 %49
    %52 = vset.pattern.permute.xlu0 1
    %53 = vperm.xlu0 %52, %v16
    %v54 = vpop.permute.xlu0 %53
    %56 = vset.pattern.permute.xlu0 1
    %57 = vperm.xlu0 %56, %v17
    %v58 = vpop.permute.xlu0 %57
    %60 = vset.pattern.permute.xlu0 1
    %61 = vperm.xlu0 %60, %v18
    %v62 = vpop.permute.xlu0 %61
    %v64 = vlaneseq
    %v65 = vshrl.u32 %v64, 7
    %v66 = vsub.s32 1, %v65
    %v67 = vrot.slane %v19, %v66
    %v68 = vmul.f32 %v50, %v67
    %v69 = vmul.f32 %v54, %v67
    %v70 = vmul.f32 %v58, %v67
    %v71 = vmul.f32 %v62, %v67
    %v72 = vadd.f32 %v44, %v68
    %v73 = vadd.f32 %v45, %v69
    %v74 = vadd.f32 %v46, %v70
    %v75 = vadd.f32 %v47, %v71
    %76 = vset.pattern.permute.xlu0 2
    %77 = vperm.xlu0 %76, %v15
    %v78 = vpop.permute.xlu0 %77
    %80 = vset.pattern.permute.xlu0 2
    %81 = vperm.xlu0 %80, %v16
    %v82 = vpop.permute.xlu0 %81
    %84 = vset.pattern.permute.xlu0 2
    %85 = vperm.xlu0 %84, %v17
    %v86 = vpop.permute.xlu0 %85
    %88 = vset.pattern.permute.xlu0 2
    %89 = vperm.xlu0 %88, %v18
    %v90 = vpop.permute.xlu0 %89
    %v92 = vlaneseq
    %v93 = vshrl.u32 %v92, 7
    %v94 = vsub.s32 2, %v93
    %v95 = vrot.slane %v19, %v94
    %v96 = vmul.f32 %v78, %v95
    %v97 = vmul.f32 %v82, %v95
    %v98 = vmul.f32 %v86, %v95
    %v99 = vmul.f32 %v90, %v95
    %v100 = vadd.f32 %v72, %v96
    %v101 = vadd.f32 %v73, %v97
    %v102 = vadd.f32 %v74, %v98
    %v103 = vadd.f32 %v75, %v99
    %104 = vset.pattern.permute.xlu0 3
    %105 = vperm.xlu0 %104, %v15
    %v106 = vpop.permute.xlu0 %105
    %108 = vset.pattern.permute.xlu0 3
    %109 = vperm.xlu0 %108, %v16
    %v110 = vpop.permute.xlu0 %109
    %112 = vset.pattern.permute.xlu0 3
    %113 = vperm.xlu0 %112, %v17
    %v114 = vpop.permute.xlu0 %113
    %116 = vset.pattern.permute.xlu0 3
    %117 = vperm.xlu0 %116, %v18
    %v118 = vpop.permute.xlu0 %117
    %v120 = vlaneseq
    %v121 = vshrl.u32 %v120, 7
    %v122 = vsub.s32 3, %v121
    %v123 = vrot.slane %v19, %v122
    %v124 = vmul.f32 %v106, %v123
    %v125 = vmul.f32 %v110, %v123
    %v126 = vmul.f32 %v114, %v123
    %v127 = vmul.f32 %v118, %v123
    %v128 = vadd.f32 %v100, %v124
    %v129 = vadd.f32 %v101, %v125
    %v130 = vadd.f32 %v102, %v126
    %v131 = vadd.f32 %v103, %v127
    %132 = vset.pattern.permute.xlu0 4
    %133 = vperm.xlu0 %132, %v15
    %v134 = vpop.permute.xlu0 %133
    %136 = vset.pattern.permute.xlu0 4
    %137 = vperm.xlu0 %136, %v16
    %v138 = vpop.permute.xlu0 %137
    %140 = vset.pattern.permute.xlu0 4
    %141 = vperm.xlu0 %140, %v17
    %v142 = vpop.permute.xlu0 %141
    %144 = vset.pattern.permute.xlu0 4
    %145 = vperm.xlu0 %144, %v18
    %v146 = vpop.permute.xlu0 %145
    %v148 = vlaneseq
    %v149 = vshrl.u32 %v148, 7
    %v150 = vsub.s32 4, %v149
    %v151 = vrot.slane %v19, %v150
    %v152 = vmul.f32 %v134, %v151
    %v153 = vmul.f32 %v138, %v151
    %v154 = vmul.f32 %v142, %v151
    %v155 = vmul.f32 %v146, %v151
    %v156 = vadd.f32 %v128, %v152
    %v157 = vadd.f32 %v129, %v153
    %v158 = vadd.f32 %v130, %v154
    %v159 = vadd.f32 %v131, %v155
    %160 = vset.pattern.permute.xlu0 5
    %161 = vperm.xlu0 %160, %v15
    %v162 = vpop.permute.xlu0 %161
    %164 = vset.pattern.permute.xlu0 5
    %165 = vperm.xlu0 %164, %v16
    %v166 = vpop.permute.xlu0 %165
    %168 = vset.pattern.permute.xlu0 5
    %169 = vperm.xlu0 %168, %v17
    %v170 = vpop.permute.xlu0 %169
    %172 = vset.pattern.permute.xlu0 5
    %173 = vperm.xlu0 %172, %v18
    %v174 = vpop.permute.xlu0 %173
    %v176 = vlaneseq
    %v177 = vshrl.u32 %v176, 7
    %v178 = vsub.s32 5, %v177
    %v179 = vrot.slane %v19, %v178
    %v180 = vmul.f32 %v162, %v179
    %v181 = vmul.f32 %v166, %v179
    %v182 = vmul.f32 %v170, %v179
    %v183 = vmul.f32 %v174, %v179
    %v184 = vadd.f32 %v156, %v180
    %v185 = vadd.f32 %v157, %v181
    %v186 = vadd.f32 %v158, %v182
    %v187 = vadd.f32 %v159, %v183
    %188 = vset.pattern.permute.xlu0 6
    %189 = vperm.xlu0 %188, %v15
    %v190 = vpop.permute.xlu0 %189
    %192 = vset.pattern.permute.xlu0 6
    %193 = vperm.xlu0 %192, %v16
    %v194 = vpop.permute.xlu0 %193
    %196 = vset.pattern.permute.xlu0 6
    %197 = vperm.xlu0 %196, %v17
    %v198 = vpop.permute.xlu0 %197
    %200 = vset.pattern.permute.xlu0 6
    %201 = vperm.xlu0 %200, %v18
    %v202 = vpop.permute.xlu0 %201
    %v204 = vlaneseq
    %v205 = vshrl.u32 %v204, 7
    %v206 = vsub.s32 6, %v205
    %v207 = vrot.slane %v19, %v206
    %v208 = vmul.f32 %v190, %v207
    %v209 = vmul.f32 %v194, %v207
    %v210 = vmul.f32 %v198, %v207
    %v211 = vmul.f32 %v202, %v207
    %v212 = vadd.f32 %v184, %v208
    %v213 = vadd.f32 %v185, %v209
    %v214 = vadd.f32 %v186, %v210
    %v215 = vadd.f32 %v187, %v211
    %216 = vset.pattern.permute.xlu0 7
    %217 = vperm.xlu0 %216, %v15
    %v218 = vpop.permute.xlu0 %217
    %220 = vset.pattern.permute.xlu0 7
    %221 = vperm.xlu0 %220, %v16
    %v222 = vpop.permute.xlu0 %221
    %224 = vset.pattern.permute.xlu0 7
    %225 = vperm.xlu0 %224, %v17
    %v226 = vpop.permute.xlu0 %225
    %228 = vset.pattern.permute.xlu0 7
    %229 = vperm.xlu0 %228, %v18
    %v230 = vpop.permute.xlu0 %229
    %v232 = vlaneseq
    %v233 = vshrl.u32 %v232, 7
    %v234 = vsub.s32 7, %v233
    %v235 = vrot.slane %v19, %v234
    %v236 = vmul.f32 %v218, %v235
    %v237 = vmul.f32 %v222, %v235
    %v238 = vmul.f32 %v226, %v235
    %v239 = vmul.f32 %v230, %v235
    %v240 = vadd.f32 %v212, %v236
    %v241 = vadd.f32 %v213, %v237
    %v242 = vadd.f32 %v214, %v238
    %v243 = vadd.f32 %v215, %v239
    %v244 = vld [vmem:[%s1] sm:$0x1]
    %v245 = vmul.f32 %v244, 0.62831855
    %vm246 = vcmp.eq.f32.partialorder %v240, 0.0
    %vm247 = vcmp.eq.f32.partialorder %v241, 0.0
    %vm248 = vcmp.eq.f32.partialorder %v242, 0.0
    %vm249 = vcmp.eq.f32.partialorder %v243, 0.0
    %v250 = vsel %vm246, 1.0, %v240
    %v251 = vsel %vm247, 1.0, %v241
    %v252 = vsel %vm248, 1.0, %v242
    %v253 = vsel %vm249, 1.0, %v243
    %v255 = vlaneseq
    %v256 = vshrl.u32 %v255, 7
    %v257 = vsub.s32 0, %v256
    %v258 = vrot.slane %v245, %v257
    %v260 = vmul.f32 %v258, %v240
    %v261 = vmul.f32 %v258, %v241
    %v262 = vmul.f32 %v258, %v242
    %v263 = vmul.f32 %v258, %v243
    %v264 = vand.u32 2147483647, %v260
    %vm265 = vcmp.le.f32.partialorder %v264, 0.7853982
    %vm266 = vcmp.lt.s32.totalorder %v260, 0
    %v267 = vand.u32 %v260, 2139095040
    %v268 = vshrl.u32 %v267, 23
    %v269 = vsub.s32 %v268, 127
    %v270 = vand.u32 2147483647, %v260
    %v271 = vand.u32 %v270, 8388607
    %v272 = vor.u32 %v271, 8388608
    %v273 = vsub.s32 0, %v272
    %v274 = vadd.s32 %v269, 1
    %vm275 = vcmp.gt.s32.totalorder %v274, 0
    %v276 = vsel %vm275, %v274, 0
    %v277 = vshrl.u32 %v276, 5
    %v278 = vand.u32 %v276, 31
    %v279 = vsub.s32 32, %v278
    %v280 = vshrl.u32 683565275, %v279
    %v281 = vshll.u32 683565275, %v278
    %v282 = vshrl.u32 2475754826, %v279
    %v283 = vor.u32 %v281, %v282
    %v284 = vshll.u32 2475754826, %v278
    %v285 = vshrl.u32 2131351028, %v279
    %v286 = vor.u32 %v284, %v285
    %v287 = vshll.u32 2131351028, %v278
    %v288 = vshrl.u32 2102212464, %v279
    %v289 = vor.u32 %v287, %v288
    %v290 = vshll.u32 2102212464, %v278
    %v291 = vshrl.u32 920167782, %v279
    %v292 = vor.u32 %v290, %v291
    %v293 = vshll.u32 920167782, %v278
    %v294 = vshrl.u32 1326507024, %v279
    %v295 = vor.u32 %v293, %v294
    %vm296 = vcmp.lt.s32.totalorder %v277, 1
    %vm297 = vcmp.lt.s32.totalorder %v277, 2
    %vm298 = vcmp.lt.s32.totalorder %v277, 3
    %vm299 = vcmp.lt.s32.totalorder %v277, 4
    %v300 = vsel %vm296, %v280, %v283
    %v301 = vsel %vm299, %v289, 2102212464
    %v302 = vsel %vm298, %v286, %v301
    %v303 = vsel %vm297, %v300, %v302
    %v304 = vsel %vm296, %v283, %v286
    %v305 = vsel %vm299, %v292, 920167782
    %v306 = vsel %vm298, %v289, %v305
    %v307 = vsel %vm297, %v304, %v306
    %v308 = vsel %vm296, %v286, %v289
    %v309 = vsel %vm299, %v295, 1326507024
    %v310 = vsel %vm298, %v292, %v309
    %v311 = vsel %vm297, %v308, %v310
    %v312 = vshll.u32 %v272, 8
    %v313 = vmul.u32.u64.compose %v312, %v311
    %v314 = vextract.low.u32 %v313
    %v315 = vextract.high.u32 %v313
    %v316 = vmul.u32.u64.compose %v312, %v307
    %v317 = vextract.low.u32 %v316
    %v318 = vextract.high.u32 %v316
    %v319 = vmul.u32 %v312, %v303
    %v320 = vadd.s32 %v315, %v317
    %vm321 = vc.u32 %v315, %v317
    %v322 = vadd.s32 %v318, 1
    %v323 = vsel %vm321, %v322, %v318
    %v324 = vadd.s32 %v319, %v323
    %v325 = vadd.s32 %v324, 536870912
    %v326 = vshrl.u32 %v325, 30
    %v327 = vshll.u32 %v326, 30
    %v328 = vsub.s32 %v324, %v327
    %vm329 = vcmp.lt.s32.totalorder %v328, 0
    %v330 = vsub.s32 0, %v328
    %v331 = vsel %vm329, %v330, %v328
    %v332 = vclz %v331
    %v333 = vsub.s32 %v332, 2
    %vm334 = vcmp.gt.s32.totalorder 0, %v333
    %v335 = vsel %vm334, 0, %v333
    %v336 = vsub.s32 32, %v335
    %v337 = vshll.u32 %v328, %v335
    %v338 = vshrl.u32 %v320, %v336
    %v339 = vor.u32 %v337, %v338
    %v340 = vsub.s32 4294967266, %v335
    %v341 = vadd.s32 %v340, 127
    %v342 = vshll.u32 %v341, 23
    %v343 = vor.u32 4788187, %v342
    %v344 = vand.u32 2147483647, %v343
    %v346 = vcvt.s32.f32 %v339
    %v347 = vmul.f32 %v346, %v344
    %v348 = vxor.u32 %v347, 2147483648
    %v349 = vsel %vm266, %v348, %v347
    %v350 = vsub.s32 4, %v326
    %v351 = vsel %vm266, %v350, %v326
    %v352 = vsel %vm265, %v260, %v349
    %v353 = vsel %vm265, 0, %v351
    %v354 = vcosq.f32.pop %v352
    %v355 = vsinq.f32.pop %v352
    %vm356 = vweird.f32 %v260
    %v357 = vadd.s32 %v353, 3
    %v358 = vand.u32 %v357, 3
    %vm359 = vcmp.lt.s32.totalorder %v358, 2
    %vm360 = vcmp.eq.s32.totalorder %v358, 0
    %v361 = vxor.u32 %v355, 2147483648
    %v362 = vsel %vm360, %v354, %v361
    %vm363 = vcmp.eq.s32.totalorder %v358, 2
    %v364 = vxor.u32 %v354, 2147483648
    %v365 = vsel %vm363, %v364, %v355
    %v366 = vsel %vm359, %v362, %v365
    %v367 = vsel %vm356, nan, %v366
    %v368 = vand.u32 2147483647, %v261
    %vm369 = vcmp.le.f32.partialorder %v368, 0.7853982
    %vm370 = vcmp.lt.s32.totalorder %v261, 0
    %v371 = vand.u32 %v261, 2139095040
    %v372 = vshrl.u32 %v371, 23
    %v373 = vsub.s32 %v372, 127
    %v374 = vand.u32 2147483647, %v261
    %v375 = vand.u32 %v374, 8388607
    %v376 = vor.u32 %v375, 8388608
    %v377 = vsub.s32 0, %v376
    %v378 = vadd.s32 %v373, 1
    %vm379 = vcmp.gt.s32.totalorder %v378, 0
    %v380 = vsel %vm379, %v378, 0
    %v381 = vshrl.u32 %v380, 5
    %v382 = vand.u32 %v380, 31
    %v383 = vsub.s32 32, %v382
    %v384 = vshrl.u32 683565275, %v383
    %v385 = vshll.u32 683565275, %v382
    %v386 = vshrl.u32 2475754826, %v383
    %v387 = vor.u32 %v385, %v386
    %v388 = vshll.u32 2475754826, %v382
    %v389 = vshrl.u32 2131351028, %v383
    %v390 = vor.u32 %v388, %v389
    %v391 = vshll.u32 2131351028, %v382
    %v392 = vshrl.u32 2102212464, %v383
    %v393 = vor.u32 %v391, %v392
    %v394 = vshll.u32 2102212464, %v382
    %v395 = vshrl.u32 920167782, %v383
    %v396 = vor.u32 %v394, %v395
    %v397 = vshll.u32 920167782, %v382
    %v398 = vshrl.u32 1326507024, %v383
    %v399 = vor.u32 %v397, %v398
    %vm400 = vcmp.lt.s32.totalorder %v381, 1
    %vm401 = vcmp.lt.s32.totalorder %v381, 2
    %vm402 = vcmp.lt.s32.totalorder %v381, 3
    %vm403 = vcmp.lt.s32.totalorder %v381, 4
    %v404 = vsel %vm400, %v384, %v387
    %v405 = vsel %vm403, %v393, 2102212464
    %v406 = vsel %vm402, %v390, %v405
    %v407 = vsel %vm401, %v404, %v406
    %v408 = vsel %vm400, %v387, %v390
    %v409 = vsel %vm403, %v396, 920167782
    %v410 = vsel %vm402, %v393, %v409
    %v411 = vsel %vm401, %v408, %v410
    %v412 = vsel %vm400, %v390, %v393
    %v413 = vsel %vm403, %v399, 1326507024
    %v414 = vsel %vm402, %v396, %v413
    %v415 = vsel %vm401, %v412, %v414
    %v416 = vshll.u32 %v376, 8
    %v417 = vmul.u32.u64.compose %v416, %v415
    %v418 = vextract.low.u32 %v417
    %v419 = vextract.high.u32 %v417
    %v420 = vmul.u32.u64.compose %v416, %v411
    %v421 = vextract.low.u32 %v420
    %v422 = vextract.high.u32 %v420
    %v423 = vmul.u32 %v416, %v407
    %v424 = vadd.s32 %v419, %v421
    %vm425 = vc.u32 %v419, %v421
    %v426 = vadd.s32 %v422, 1
    %v427 = vsel %vm425, %v426, %v422
    %v428 = vadd.s32 %v423, %v427
    %v429 = vadd.s32 %v428, 536870912
    %v430 = vshrl.u32 %v429, 30
    %v431 = vshll.u32 %v430, 30
    %v432 = vsub.s32 %v428, %v431
    %vm433 = vcmp.lt.s32.totalorder %v432, 0
    %v434 = vsub.s32 0, %v432
    %v435 = vsel %vm433, %v434, %v432
    %v436 = vclz %v435
    %v437 = vsub.s32 %v436, 2
    %vm438 = vcmp.gt.s32.totalorder 0, %v437
    %v439 = vsel %vm438, 0, %v437
    %v440 = vsub.s32 32, %v439
    %v441 = vshll.u32 %v432, %v439
    %v442 = vshrl.u32 %v424, %v440
    %v443 = vor.u32 %v441, %v442
    %v444 = vsub.s32 4294967266, %v439
    %v445 = vadd.s32 %v444, 127
    %v446 = vshll.u32 %v445, 23
    %v447 = vor.u32 4788187, %v446
    %v448 = vand.u32 2147483647, %v447
    %v450 = vcvt.s32.f32 %v443
    %v451 = vmul.f32 %v450, %v448
    %v452 = vxor.u32 %v451, 2147483648
    %v453 = vsel %vm370, %v452, %v451
    %v454 = vsub.s32 4, %v430
    %v455 = vsel %vm370, %v454, %v430
    %v456 = vsel %vm369, %v261, %v453
    %v457 = vsel %vm369, 0, %v455
    %v458 = vcosq.f32.pop %v456
    %v459 = vsinq.f32.pop %v456
    %vm460 = vweird.f32 %v261
    %v461 = vadd.s32 %v457, 3
    %v462 = vand.u32 %v461, 3
    %vm463 = vcmp.lt.s32.totalorder %v462, 2
    %vm464 = vcmp.eq.s32.totalorder %v462, 0
    %v465 = vxor.u32 %v459, 2147483648
    %v466 = vsel %vm464, %v458, %v465
    %vm467 = vcmp.eq.s32.totalorder %v462, 2
    %v468 = vxor.u32 %v458, 2147483648
    %v469 = vsel %vm467, %v468, %v459
    %v470 = vsel %vm463, %v466, %v469
    %v471 = vsel %vm460, nan, %v470
    %v472 = vand.u32 2147483647, %v262
    %vm473 = vcmp.le.f32.partialorder %v472, 0.7853982
    %vm474 = vcmp.lt.s32.totalorder %v262, 0
    %v475 = vand.u32 %v262, 2139095040
    %v476 = vshrl.u32 %v475, 23
    %v477 = vsub.s32 %v476, 127
    %v478 = vand.u32 2147483647, %v262
    %v479 = vand.u32 %v478, 8388607
    %v480 = vor.u32 %v479, 8388608
    %v481 = vsub.s32 0, %v480
    %v482 = vadd.s32 %v477, 1
    %vm483 = vcmp.gt.s32.totalorder %v482, 0
    %v484 = vsel %vm483, %v482, 0
    %v485 = vshrl.u32 %v484, 5
    %v486 = vand.u32 %v484, 31
    %v487 = vsub.s32 32, %v486
    %v488 = vshrl.u32 683565275, %v487
    %v489 = vshll.u32 683565275, %v486
    %v490 = vshrl.u32 2475754826, %v487
    %v491 = vor.u32 %v489, %v490
    %v492 = vshll.u32 2475754826, %v486
    %v493 = vshrl.u32 2131351028, %v487
    %v494 = vor.u32 %v492, %v493
    %v495 = vshll.u32 2131351028, %v486
    %v496 = vshrl.u32 2102212464, %v487
    %v497 = vor.u32 %v495, %v496
    %v498 = vshll.u32 2102212464, %v486
    %v499 = vshrl.u32 920167782, %v487
    %v500 = vor.u32 %v498, %v499
    %v501 = vshll.u32 920167782, %v486
    %v502 = vshrl.u32 1326507024, %v487
    %v503 = vor.u32 %v501, %v502
    %vm504 = vcmp.lt.s32.totalorder %v485, 1
    %vm505 = vcmp.lt.s32.totalorder %v485, 2
    %vm506 = vcmp.lt.s32.totalorder %v485, 3
    %vm507 = vcmp.lt.s32.totalorder %v485, 4
    %v508 = vsel %vm504, %v488, %v491
    %v509 = vsel %vm507, %v497, 2102212464
    %v510 = vsel %vm506, %v494, %v509
    %v511 = vsel %vm505, %v508, %v510
    %v512 = vsel %vm504, %v491, %v494
    %v513 = vsel %vm507, %v500, 920167782
    %v514 = vsel %vm506, %v497, %v513
    %v515 = vsel %vm505, %v512, %v514
    %v516 = vsel %vm504, %v494, %v497
    %v517 = vsel %vm507, %v503, 1326507024
    %v518 = vsel %vm506, %v500, %v517
    %v519 = vsel %vm505, %v516, %v518
    %v520 = vshll.u32 %v480, 8
    %v521 = vmul.u32.u64.compose %v520, %v519
    %v522 = vextract.low.u32 %v521
    %v523 = vextract.high.u32 %v521
    %v524 = vmul.u32.u64.compose %v520, %v515
    %v525 = vextract.low.u32 %v524
    %v526 = vextract.high.u32 %v524
    %v527 = vmul.u32 %v520, %v511
    %v528 = vadd.s32 %v523, %v525
    %vm529 = vc.u32 %v523, %v525
    %v530 = vadd.s32 %v526, 1
    %v531 = vsel %vm529, %v530, %v526
    %v532 = vadd.s32 %v527, %v531
    %v533 = vadd.s32 %v532, 536870912
    %v534 = vshrl.u32 %v533, 30
    %v535 = vshll.u32 %v534, 30
    %v536 = vsub.s32 %v532, %v535
    %vm537 = vcmp.lt.s32.totalorder %v536, 0
    %v538 = vsub.s32 0, %v536
    %v539 = vsel %vm537, %v538, %v536
    %v540 = vclz %v539
    %v541 = vsub.s32 %v540, 2
    %vm542 = vcmp.gt.s32.totalorder 0, %v541
    %v543 = vsel %vm542, 0, %v541
    %v544 = vsub.s32 32, %v543
    %v545 = vshll.u32 %v536, %v543
    %v546 = vshrl.u32 %v528, %v544
    %v547 = vor.u32 %v545, %v546
    %v548 = vsub.s32 4294967266, %v543
    %v549 = vadd.s32 %v548, 127
    %v550 = vshll.u32 %v549, 23
    %v551 = vor.u32 4788187, %v550
    %v552 = vand.u32 2147483647, %v551
    %v554 = vcvt.s32.f32 %v547
    %v555 = vmul.f32 %v554, %v552
    %v556 = vxor.u32 %v555, 2147483648
    %v557 = vsel %vm474, %v556, %v555
    %v558 = vsub.s32 4, %v534
    %v559 = vsel %vm474, %v558, %v534
    %v560 = vsel %vm473, %v262, %v557
    %v561 = vsel %vm473, 0, %v559
    %v562 = vcosq.f32.pop %v560
    %v563 = vsinq.f32.pop %v560
    %vm564 = vweird.f32 %v262
    %v565 = vadd.s32 %v561, 3
    %v566 = vand.u32 %v565, 3
    %vm567 = vcmp.lt.s32.totalorder %v566, 2
    %vm568 = vcmp.eq.s32.totalorder %v566, 0
    %v569 = vxor.u32 %v563, 2147483648
    %v570 = vsel %vm568, %v562, %v569
    %vm571 = vcmp.eq.s32.totalorder %v566, 2
    %v572 = vxor.u32 %v562, 2147483648
    %v573 = vsel %vm571, %v572, %v563
    %v574 = vsel %vm567, %v570, %v573
    %v575 = vsel %vm564, nan, %v574
    %v576 = vand.u32 2147483647, %v263
    %vm577 = vcmp.le.f32.partialorder %v576, 0.7853982
    %vm578 = vcmp.lt.s32.totalorder %v263, 0
    %v579 = vand.u32 %v263, 2139095040
    %v580 = vshrl.u32 %v579, 23
    %v581 = vsub.s32 %v580, 127
    %v582 = vand.u32 2147483647, %v263
    %v583 = vand.u32 %v582, 8388607
    %v584 = vor.u32 %v583, 8388608
    %v585 = vsub.s32 0, %v584
    %v586 = vadd.s32 %v581, 1
    %vm587 = vcmp.gt.s32.totalorder %v586, 0
    %v588 = vsel %vm587, %v586, 0
    %v589 = vshrl.u32 %v588, 5
    %v590 = vand.u32 %v588, 31
    %v591 = vsub.s32 32, %v590
    %v592 = vshrl.u32 683565275, %v591
    %v593 = vshll.u32 683565275, %v590
    %v594 = vshrl.u32 2475754826, %v591
    %v595 = vor.u32 %v593, %v594
    %v596 = vshll.u32 2475754826, %v590
    %v597 = vshrl.u32 2131351028, %v591
    %v598 = vor.u32 %v596, %v597
    %v599 = vshll.u32 2131351028, %v590
    %v600 = vshrl.u32 2102212464, %v591
    %v601 = vor.u32 %v599, %v600
    %v602 = vshll.u32 2102212464, %v590
    %v603 = vshrl.u32 920167782, %v591
    %v604 = vor.u32 %v602, %v603
    %v605 = vshll.u32 920167782, %v590
    %v606 = vshrl.u32 1326507024, %v591
    %v607 = vor.u32 %v605, %v606
    %vm608 = vcmp.lt.s32.totalorder %v589, 1
    %vm609 = vcmp.lt.s32.totalorder %v589, 2
    %vm610 = vcmp.lt.s32.totalorder %v589, 3
    %vm611 = vcmp.lt.s32.totalorder %v589, 4
    %v612 = vsel %vm608, %v592, %v595
    %v613 = vsel %vm611, %v601, 2102212464
    %v614 = vsel %vm610, %v598, %v613
    %v615 = vsel %vm609, %v612, %v614
    %v616 = vsel %vm608, %v595, %v598
    %v617 = vsel %vm611, %v604, 920167782
    %v618 = vsel %vm610, %v601, %v617
    %v619 = vsel %vm609, %v616, %v618
    %v620 = vsel %vm608, %v598, %v601
    %v621 = vsel %vm611, %v607, 1326507024
    %v622 = vsel %vm610, %v604, %v621
    %v623 = vsel %vm609, %v620, %v622
    %v624 = vshll.u32 %v584, 8
    %v625 = vmul.u32.u64.compose %v624, %v623
    %v626 = vextract.low.u32 %v625
    %v627 = vextract.high.u32 %v625
    %v628 = vmul.u32.u64.compose %v624, %v619
    %v629 = vextract.low.u32 %v628
    %v630 = vextract.high.u32 %v628
    %v631 = vmul.u32 %v624, %v615
    %v632 = vadd.s32 %v627, %v629
    %vm633 = vc.u32 %v627, %v629
    %v634 = vadd.s32 %v630, 1
    %v635 = vsel %vm633, %v634, %v630
    %v636 = vadd.s32 %v631, %v635
    %v637 = vadd.s32 %v636, 536870912
    %v638 = vshrl.u32 %v637, 30
    %v639 = vshll.u32 %v638, 30
    %v640 = vsub.s32 %v636, %v639
    %vm641 = vcmp.lt.s32.totalorder %v640, 0
    %v642 = vsub.s32 0, %v640
    %v643 = vsel %vm641, %v642, %v640
    %v644 = vclz %v643
    %v645 = vsub.s32 %v644, 2
    %vm646 = vcmp.gt.s32.totalorder 0, %v645
    %v647 = vsel %vm646, 0, %v645
    %v648 = vsub.s32 32, %v647
    %v649 = vshll.u32 %v640, %v647
    %v650 = vshrl.u32 %v632, %v648
    %v651 = vor.u32 %v649, %v650
    %v652 = vsub.s32 4294967266, %v647
    %v653 = vadd.s32 %v652, 127
    %v654 = vshll.u32 %v653, 23
    %v655 = vor.u32 4788187, %v654
    %v656 = vand.u32 2147483647, %v655
    %v658 = vcvt.s32.f32 %v651
    %v659 = vmul.f32 %v658, %v656
    %v660 = vxor.u32 %v659, 2147483648
    %v661 = vsel %vm578, %v660, %v659
    %v662 = vsub.s32 4, %v638
    %v663 = vsel %vm578, %v662, %v638
    %v664 = vsel %vm577, %v263, %v661
    %v665 = vsel %vm577, 0, %v663
    %v666 = vcosq.f32.pop %v664
    %v667 = vsinq.f32.pop %v664
    %vm668 = vweird.f32 %v263
    %v669 = vadd.s32 %v665, 3
    %v670 = vand.u32 %v669, 3
    %vm671 = vcmp.lt.s32.totalorder %v670, 2
    %vm672 = vcmp.eq.s32.totalorder %v670, 0
    %v673 = vxor.u32 %v667, 2147483648
    %v674 = vsel %vm672, %v666, %v673
    %vm675 = vcmp.eq.s32.totalorder %v670, 2
    %v676 = vxor.u32 %v666, 2147483648
    %v677 = vsel %vm675, %v676, %v667
    %v678 = vsel %vm671, %v674, %v677
    %v679 = vsel %vm668, nan, %v678
    %v680 = vsel %vm246, %v258, %v367
    %v681 = vsel %vm247, %v258, %v471
    %v682 = vsel %vm248, %v258, %v575
    %v683 = vsel %vm249, %v258, %v679
    %vm684 = vcmp.ge.f32.partialorder %v240, 5.0
    %vm685 = vcmp.ge.f32.partialorder %v241, 5.0
    %vm686 = vcmp.ge.f32.partialorder %v242, 5.0
    %vm687 = vcmp.ge.f32.partialorder %v243, 5.0
    %v688 = vrcp.pop %v250
    %v689 = vmul.f32 %v680, %v688
    %v690 = vrcp.pop %v251
    %v691 = vmul.f32 %v681, %v690
    %v692 = vrcp.pop %v252
    %v693 = vmul.f32 %v682, %v692
    %v694 = vrcp.pop %v253
    %v695 = vmul.f32 %v683, %v694
    %v696 = vsel %vm684, 0.0, %v689
    %v697 = vsel %vm685, 0.0, %v691
    %v698 = vsel %vm686, 0.0, %v693
    %v699 = vsel %vm687, 0.0, %v695
    %700 = vst [vmem:[#allocation2] sm:$0xff] %v696
    %701 = vst [vmem:[#allocation2 + $0x8] sm:$0xff] %v697
    %702 = vst [vmem:[#allocation2 + $0x10] sm:$0xff] %v698
    %703 = vst [vmem:[#allocation2 + $0x18] sm:$0x1] %v699
    // Predicated region
    $region14: #{tpu_custom_call.1} parent=1 // pred_check
      _
    $region15: #{tpu_custom_call.1} parent=1 // pred_check_branch
      %705 = sbr.rel (0) target = $region17
    $region16: #{tpu_custom_call.1} parent=1 // pred_region
      %s707 = ssub.s32 512, 512
      %708 = vsyncadd [#allocation3], %s707
      %s709 = sshll.u32 [#allocation2], 4
      %s710 = int_to_ptr.vmem [resolvable:$true] %s709
      %715 = dma.vmem_to_hbm [thread:$0]  %s710, 512, %s3, [#allocation3], 128, 128, 8
    $region17: #{tpu_custom_call.1} parent=1 // pred_fallthru
      _
    // Predicated region
    $region18: #{tpu_custom_call.1} parent=1 // pred_check
      _
    $region19: #{tpu_custom_call.1} parent=1 // pred_check_branch
      %717 = sbr.rel (0) target = $region21
    $region20: #{tpu_custom_call.1} parent=1 // pred_region
      %718 = dma.done [#allocation3], 512
    $region21: #{tpu_custom_call.1} parent=1 // pred_fallthru
      _
    %719 = vsyncpa [#allocation3], 1

</llo_original>
